<compile_context>
chip_gen: v6e
topology: v6e:2x2x1
jax: 0.10.0
libtpu: 0.0.40
codegen_flags: <defaults>
</compile_context>

<pallas_src>
import jax
import jax.numpy as jnp
from jax import lax
from jax.experimental import pallas as pl
from jax.experimental.pallas import tpu as pltpu

_SMALL_N = 512        # at/below this, one grid step; launch overhead dominates anyway
_VMEM_LANES = 128     # VMEM lane padding used only for the footprint estimate


def _maml_linear_kernel(x_ref, w_ref, b_ref, o_ref):
    # x_ref : (tm, feat_dim)        VMEM  (one row tile of the batch)
    # w_ref : (way_num, feat_dim)   VMEM  (PyTorch-layout weight, grid-resident)
    # b_ref : (1, way_num)          VMEM  (grid-resident)
    # o_ref : (tm, way_num)         VMEM  (unpadded output tile)
    #
    # Contract the last dim of x with the last dim of w  ==  x @ w.T; the
    # transpose is folded into the MXU pass (no separate transpose op).
    acc = lax.dot_general(
        x_ref[...], w_ref[...],
        dimension_numbers=(((1,), (1,)), ((), ())),
        preferred_element_type=jnp.float32,
    )
    # NOTE: default matmul precision; pass precision=lax.Precision.HIGHEST here
    # if MAML inner-loop gradient sensitivity ever shows up.
    o_ref[...] = (acc + b_ref[...]).astype(o_ref.dtype)


def _pick_row_tile(n, row_tile):
    if n <= _SMALL_N:
        # Single block covering the whole batch. block dim == full array dim is
        # always legal, even when n % 8 != 0.
        return n
    if n <= 2 * row_tile:
        # Guarantee >= 2 grid steps so the "parallel" axis has work for both
        # v7x TensorCores (harmless on v5e/v6e).
        return min(row_tile, ((pl.cdiv(n, 2) + 7) // 8) * 8)
    return row_tile


def maml_layer_forward(x, weight, bias, *, row_tile=4096):
    """Pallas implementation of MAMLLayer.forward.

    x:      (N, feat_dim) float32
    weight: (way_num, feat_dim) float32   (PyTorch nn.Linear convention)
    bias:   (way_num,) float32
    returns (N, way_num) float32
    """
    n, feat_dim = x.shape
    way_num, feat_dim_w = weight.shape
    assert feat_dim == feat_dim_w
    assert bias.shape == (way_num,)

    b2d = bias.reshape(1, way_num)           # metadata-only reshape, no pad copy
    tm = _pick_row_tile(n, row_tile)
    grid = (pl.cdiv(n, tm),)                 # ragged last block handled by Pallas

    # Double-buffered VMEM footprint estimate (lane dim pads to 128 in VMEM):
    # (x block + out block) * 2 buffers.  Only raise the scoped-VMEM limit if a
    # caller-supplied row_tile would blow past v5e's 16 MiB default.
    tile_bytes = 2 * 2 * tm * _VMEM_LANES * 4
    compiler_kwargs = {"dimension_semantics": ("parallel",)}
    if tile_bytes > 12 * 1024 * 1024:
        compiler_kwargs["vmem_limit_bytes"] = min(tile_bytes + (4 << 20), 48 << 20)

    return pl.pallas_call(
        _maml_linear_kernel,
        out_shape=jax.ShapeDtypeStruct((n, way_num), x.dtype),
        grid=grid,
        in_specs=[
            pl.BlockSpec((tm, feat_dim), lambda i: (i, 0)),        # x: tiled rows
            pl.BlockSpec((way_num, feat_dim), lambda i: (0, 0)),   # W: VMEM-resident
            pl.BlockSpec((1, way_num), lambda i: (0, 0)),          # b: VMEM-resident
        ],
        out_specs=pl.BlockSpec((tm, way_num), lambda i: (i, 0)),   # unpadded output
        compiler_params=pltpu.CompilerParams(**compiler_kwargs),
    )(x, weight, b2d)


if __name__ == "__main__":
    feat_dim = 64
    way_num = 5
    batch = 8  # small episode-style batch

    key = jax.random.PRNGKey(0)
    kx, kw, kb = jax.random.split(key, 3)

    # Deterministic parameter init mimicking nn.Linear default:
    # uniform(-1/sqrt(fan_in), 1/sqrt(fan_in)) for both weight and bias.
    bound = 1.0 / jnp.sqrt(jnp.float32(feat_dim))
    weight = jax.random.uniform(kw, (way_num, feat_dim), jnp.float32,
                                minval=-bound, maxval=bound)
    bias = jax.random.uniform(kb, (way_num,), jnp.float32,
                              minval=-bound, maxval=bound)

    x = jax.random.normal(kx, (batch, feat_dim), jnp.float32)
    out = jax.block_until_ready(maml_layer_forward(x, weight, bias))

    # Reference check against plain JAX (same math as PyTorch Linear).
    ref = x @ weight.T + bias
    assert out.shape == (batch, way_num)
    assert jnp.allclose(out, ref, atol=1e-5, rtol=1e-5)

    # Multi-step grid with a ragged last block (no wrapper padding of x):
    # default row_tile -> 2 grid steps (tm ~ ceil(N/2)), second block partial.
    big_n = 2500
    xb = jax.random.normal(kx, (big_n, feat_dim), jnp.float32)
    out_big = jax.block_until_ready(maml_layer_forward(xb, weight, bias))
    ref_big = xb @ weight.T + bias
    assert out_big.shape == (big_n, way_num)
    assert jnp.allclose(out_big, ref_big, atol=1e-5, rtol=1e-5)

    # Force a small row_tile to exercise the many-tile path with a ragged tail
    # (5 grid steps, last block = 452 rows).
    out_tiled = jax.block_until_ready(
        maml_layer_forward(xb, weight, bias, row_tile=512))
    assert jnp.allclose(out_tiled, ref_big, atol=1e-5, rtol=1e-5)

    print("KERNEL_OK")
</pallas_src>

<mosaic_0001>
module attributes {stable_mosaic.version = 11 : i64} {
  func.func @_maml_linear_kernel(%arg0: i32, %arg1: memref<8x64xf32, #tpu.memory_space<vmem>>, %arg2: memref<5x64xf32, #tpu.memory_space<vmem>>, %arg3: memref<1x5xf32, #tpu.memory_space<vmem>>, %arg4: memref<8x5xf32, #tpu.memory_space<vmem>>) attributes {dimension_semantics = [#tpu.dimension_semantics<parallel>], iteration_bounds = array<i64: 1>, scalar_prefetch = 0 : i64, scratch_operands = 0 : i64, tpu.core_type = #tpu.core_type<tc>, window_params = [{transform_indices = @transform_0, window_bounds = array<i64: 8, 64>}, {pipeline_mode = #tpu.pipeline_mode<synchronous>, transform_indices = @transform_1, window_bounds = array<i64: 5, 64>}, {pipeline_mode = #tpu.pipeline_mode<synchronous>, transform_indices = @transform_2, window_bounds = array<i64: 1, 5>}, {transform_indices = @transform_3, window_bounds = array<i64: 8, 5>}]} {
    %c0 = arith.constant 0 : index
    %c0_0 = arith.constant 0 : index
    %0 = vector.load %arg1[%c0, %c0_0] : memref<8x64xf32, #tpu.memory_space<vmem>>, vector<8x64xf32>
    %c0_1 = arith.constant 0 : index
    %c0_2 = arith.constant 0 : index
    %1 = vector.load %arg2[%c0_1, %c0_2] : memref<5x64xf32, #tpu.memory_space<vmem>>, vector<5x64xf32>
    %cst = arith.constant dense<0.000000e+00> : vector<8x5xf32>
    %2 = tpu.matmul %0, %1, %cst {dimension_numbers = #tpu.dot_dimension_numbers<[1], [1], [0], [0], [0, 0, 1, 0], [], []>} : vector<8x64xf32>, vector<5x64xf32>, vector<8x5xf32> -> vector<8x5xf32>
    %c0_3 = arith.constant 0 : index
    %c0_4 = arith.constant 0 : index
    %3 = vector.load %arg3[%c0_3, %c0_4] : memref<1x5xf32, #tpu.memory_space<vmem>>, vector<1x5xf32>
    %4 = vector.broadcast %3 : vector<1x5xf32> to vector<8x5xf32>
    %5 = arith.addf %2, %4 : vector<8x5xf32>
    %c0_5 = arith.constant 0 : index
    %c0_6 = arith.constant 0 : index
    %6 = vector.load %arg4[%c0_5, %c0_6] : memref<8x5xf32, #tpu.memory_space<vmem>>, vector<8x5xf32>
    tpu.vector_store %arg4[%c0_5, %c0_6], %5 {strides = array<i32>} : memref<8x5xf32, #tpu.memory_space<vmem>>, vector<8x5xf32>,
    return
  }
  func.func @transform_0(%arg0: i32) -> (i32, i32) {
    %c0_i32 = arith.constant 0 : i32
    %c0_i32_0 = arith.constant 0 : i32
    return %arg0, %c0_i32 : i32, i32
  }
  func.func @transform_1(%arg0: i32) -> (i32, i32) {
    %c0_i32 = arith.constant 0 : i32
    %c0_i32_0 = arith.constant 0 : i32
    %c0_i32_1 = arith.constant 0 : i32
    return %c0_i32, %c0_i32_0 : i32, i32
  }
  func.func @transform_2(%arg0: i32) -> (i32, i32) {
    %c0_i32 = arith.constant 0 : i32
    %c0_i32_0 = arith.constant 0 : i32
    %c0_i32_1 = arith.constant 0 : i32
    return %c0_i32, %c0_i32_0 : i32, i32
  }
  func.func @transform_3(%arg0: i32) -> (i32, i32) {
    %c0_i32 = arith.constant 0 : i32
    %c0_i32_0 = arith.constant 0 : i32
    return %arg0, %c0_i32 : i32, i32
  }
}

</mosaic_0001>

<llo_original>
// kernel: tpu_custom_call.1
$region0: #{tpu_custom_call.1}
  #allocation0 [shape = 'u32[]', space=smem, size = 0x4, offset = 0x4, fixed_abs, tag = 'smem constant byte address 0x4 - core index']
  #allocation1 [shape = 'u32[144,128]{1,0:T(1,128)}', space=vmem, size = 0x12000, scoped, tag = 'internal scratch']
  %s0 = inlined_call_operand.hbm [shape: f32[8,64], index: 0, kind: input, shape index: {}]
  %s1 = inlined_call_operand.hbm [shape: f32[5,64], index: 1, kind: input, shape index: {}]
  %s2 = inlined_call_operand.vmem [shape: f32[1,5], index: 2, kind: input, shape index: {}]
  %s3 = inlined_call_operand.hbm [shape: f32[8,5], index: 3, kind: output, shape index: {}]
  %s4 = sld [smem:[#allocation0]]
  $region30: #{tpu_custom_call.1} parent=0
    _
  %s6 = ssub.s32 1, %s4
  %s7 = scalar_select 0, %s6, %s4
  $region1: #{tpu_custom_call.1} parent=0
    #allocation2 [shape = 'u8[4096]{0}', space=vmem, size = 0x1000, scoped, tag = 'input window, operand 0, single buffered']
    #allocation3 [shape = 's32[1]{0}', space=sflag, size = 0x4, scoped, tag = 'scoped memory for tpu_custom_call.1']
    #allocation4 [shape = 's32[1]{0}', space=sflag, size = 0x4, scoped, tag = 'scoped memory for tpu_custom_call.1']
    #allocation5 [shape = 'u8[4096]{0}', space=vmem, size = 0x1000, scoped, tag = 'input window, operand 1, single buffered']
    #allocation6 [shape = 's32[1]{0}', space=sflag, size = 0x4, scoped, tag = 'scoped memory for tpu_custom_call.1']
    #allocation7 [shape = 'u8[4096]{0}', space=vmem, size = 0x1000, scoped, tag = 'output window, operand 0, single buffered']
    %8 = vsyncpa [#allocation3], 0
    %9 = vsyncpa [#allocation6], 0
    %10 = vsyncpa [#allocation4], 0
    // Predicated region
    $region2: #{tpu_custom_call.1} parent=1 // pred_check
      _
    $region3: #{tpu_custom_call.1} parent=1 // pred_check_branch
      %12 = sbr.rel (0) target = $region5
    $region4: #{tpu_custom_call.1} parent=1 // pred_region
      %s14 = ssub.s32 128, 128
      %15 = vsyncadd [#allocation3], %s14
      %s17 = sshll.u32 [#allocation2], 4
      %s18 = int_to_ptr.vmem [resolvable:$true] %s17
      %20 = dma.hbm_to_vmem [thread:$0]  %s0, 128, %s18, [#allocation3]
    $region5: #{tpu_custom_call.1} parent=1 // pred_fallthru
      _
    // Predicated region
    $region6: #{tpu_custom_call.1} parent=1 // pred_check
      _
    $region7: #{tpu_custom_call.1} parent=1 // pred_check_branch
      %22 = sbr.rel (0) target = $region9
    $region8: #{tpu_custom_call.1} parent=1 // pred_region
      %s24 = ssub.s32 128, 128
      %25 = vsyncadd [#allocation6], %s24
      %s27 = sshll.u32 [#allocation5], 4
      %s28 = int_to_ptr.vmem [resolvable:$true] %s27
      %30 = dma.hbm_to_vmem [thread:$0]  %s1, 128, %s28, [#allocation6]
    $region9: #{tpu_custom_call.1} parent=1 // pred_fallthru
      _
    // Predicated region
    $region10: #{tpu_custom_call.1} parent=1 // pred_check
      _
    $region11: #{tpu_custom_call.1} parent=1 // pred_check_branch
      %32 = sbr.rel (0) target = $region13
    $region12: #{tpu_custom_call.1} parent=1 // pred_region
      _
    $region13: #{tpu_custom_call.1} parent=1 // pred_fallthru
      _
    // Predicated region
    $region14: #{tpu_custom_call.1} parent=1 // pred_check
      _
    $region15: #{tpu_custom_call.1} parent=1 // pred_check_branch
      %34 = sbr.rel (0) target = $region17
    $region16: #{tpu_custom_call.1} parent=1 // pred_region
      %35 = dma.done [#allocation3], 128
    $region17: #{tpu_custom_call.1} parent=1 // pred_fallthru
      _
    // Predicated region
    $region18: #{tpu_custom_call.1} parent=1 // pred_check
      _
    $region19: #{tpu_custom_call.1} parent=1 // pred_check_branch
      %37 = sbr.rel (0) target = $region21
    $region20: #{tpu_custom_call.1} parent=1 // pred_region
      %38 = dma.done [#allocation6], 128
    $region21: #{tpu_custom_call.1} parent=1 // pred_fallthru
      _
    %v39 = vld [vmem:[#allocation2] sm:$0xff]
    %v40 = vld [vmem:[#allocation5] sm:$0x1f]
    %v41 = vld [vmem:[%s2] sm:$0x1]
    %v43 = vlaneseq
    %v44 = vshrl.u32 %v43, 7
    %v45 = vsub.s32 0, %v44
    %v46 = vrot.slane %v41, %v45
    %vm48 = vcmask 523264
    %v50 = vsel %vm48, %v39, 0
    %v53 = vsel %vm48, %v40, 0
    %55 = vmatprep.subr.mxu0 0.0
    %56 = vmatpush1.xpose.msra.mxu0 0.0
    %57 = vmatprep.subr.mxu0 0.0
    %58 = vmatpush1.xpose.msra.mxu0 0.0
    %59 = vmatprep.subr.mxu0 0.0
    %60 = vmatpush1.xpose.msra.mxu0 0.0
    %61 = vmatprep.subr.mxu0 0.0
    %62 = vmatpush1.xpose.msra.mxu0 0.0
    %63 = vmatprep.subr.mxu0 0.0
    %64 = vmatpush1.xpose.msra.mxu0 0.0
    %65 = vmatprep.subr.mxu0 0.0
    %66 = vmatpush1.xpose.msra.mxu0 0.0
    %67 = vmatprep.subr.mxu0 0.0
    %68 = vmatpush1.xpose.msra.mxu0 0.0
    %69 = vmatprep.subr.mxu0 0.0
    %70 = vmatpush1.xpose.msra.mxu0 0.0
    %71 = vmatprep.subr.mxu0 0.0
    %72 = vmatpush1.xpose.msra.mxu0 0.0
    %73 = vmatprep.subr.mxu0 0.0
    %74 = vmatpush1.xpose.msra.mxu0 0.0
    %75 = vmatprep.subr.mxu0 0.0
    %76 = vmatpush1.xpose.msra.mxu0 0.0
    %77 = vmatprep.subr.mxu0 0.0
    %78 = vmatpush1.xpose.msra.mxu0 0.0
    %79 = vmatprep.subr.mxu0 0.0
    %80 = vmatpush1.xpose.msra.mxu0 0.0
    %81 = vmatprep.subr.mxu0 0.0
    %82 = vmatpush1.xpose.msra.mxu0 0.0
    %83 = vmatprep.subr.mxu0 0.0
    %84 = vmatpush1.xpose.msra.mxu0 0.0
    %85 = vmatprep.subr.mxu0 0.0
    %86 = vmatpush1.xpose.msra.mxu0 %v53
    %87 = vmatprep.subr.mxu0 0.0
    %88 = vmatpush2.xpose.msra.mxu0 0.0
    %89 = vmatprep.subr.mxu0 0.0
    %90 = vmatpush2.xpose.msra.mxu0 0.0
    %91 = vmatprep.subr.mxu0 0.0
    %92 = vmatpush2.xpose.msra.mxu0 0.0
    %93 = vmatprep.subr.mxu0 0.0
    %94 = vmatpush2.xpose.msra.mxu0 0.0
    %95 = vmatprep.subr.mxu0 0.0
    %96 = vmatpush2.xpose.msra.mxu0 0.0
    %97 = vmatprep.subr.mxu0 0.0
    %98 = vmatpush2.xpose.msra.mxu0 0.0
    %99 = vmatprep.subr.mxu0 0.0
    %100 = vmatpush2.xpose.msra.mxu0 0.0
    %101 = vmatprep.subr.mxu0 0.0
    %102 = vmatpush2.xpose.msra.mxu0 0.0
    %103 = vmatprep.subr.mxu0 0.0
    %104 = vmatpush2.xpose.msra.mxu0 0.0
    %105 = vmatprep.subr.mxu0 0.0
    %106 = vmatpush2.xpose.msra.mxu0 0.0
    %107 = vmatprep.subr.mxu0 0.0
    %108 = vmatpush2.xpose.msra.mxu0 0.0
    %109 = vmatprep.subr.mxu0 0.0
    %110 = vmatpush2.xpose.msra.mxu0 0.0
    %111 = vmatprep.subr.mxu0 0.0
    %112 = vmatpush2.xpose.msra.mxu0 0.0
    %113 = vmatprep.subr.mxu0 0.0
    %114 = vmatpush2.xpose.msra.mxu0 0.0
    %115 = vmatprep.subr.mxu0 0.0
    %116 = vmatpush2.xpose.msra.mxu0 0.0
    %117 = vmatprep.subr.mxu0 0.0
    %118 = vmatpush2.xpose.msra.mxu0 0.0
    %119 = vmatprep.mubr.f32.mxu0 0.0
    %120 = vmatmul.mubr.f32.gmra.mxu0 %v50
    %v121 = vpop.f32.mrf.mxu0
    %v122 = vadd.f32 %v46, %v121
    %v123 = vpop.f32.mrf.mxu0
    %124 = vdwg.mxu0
    %vm125 = vcmask 39936
    %126 = vst.msk [vmem:[#allocation7] sm:$0xff] %vm125, %v122
    // Predicated region
    $region22: #{tpu_custom_call.1} parent=1 // pred_check
      _
    $region23: #{tpu_custom_call.1} parent=1 // pred_check_branch
      %128 = sbr.rel (0) target = $region25
    $region24: #{tpu_custom_call.1} parent=1 // pred_region
      %s130 = ssub.s32 128, 128
      %131 = vsyncadd [#allocation4], %s130
      %s133 = sshll.u32 [#allocation7], 4
      %s134 = int_to_ptr.vmem [resolvable:$true] %s133
      %136 = dma.vmem_to_hbm [thread:$0]  %s134, 128, %s3, [#allocation4]
    $region25: #{tpu_custom_call.1} parent=1 // pred_fallthru
      _
    // Predicated region
    $region26: #{tpu_custom_call.1} parent=1 // pred_check
      _
    $region27: #{tpu_custom_call.1} parent=1 // pred_check_branch
      %138 = sbr.rel (0) target = $region29
    $region28: #{tpu_custom_call.1} parent=1 // pred_region
      %139 = dma.done [#allocation4], 128
    $region29: #{tpu_custom_call.1} parent=1 // pred_fallthru
      _
    %140 = vsyncpa [#allocation3], 1
    %141 = vsyncpa [#allocation6], 1
    %142 = vsyncpa [#allocation4], 1

</llo_original>
